<compile_context>
chip_gen: v6e
topology: v6e:2x2x1
jax: 0.10.0
libtpu: 0.0.40
codegen_flags: <defaults>
</compile_context>

<pallas_src>
import math

import jax
import jax.numpy as jnp
from jax.experimental import pallas as pl
from jax.experimental.pallas import tpu as pltpu


def _round_up(n, m):
    return ((n + m - 1) // m) * m


# ---------------------------------------------------------------------------
# Pallas kernel: fused 2-layer MLP  (x @ W1 + b1) -> ReLU -> (@ W2 + b2)
# ---------------------------------------------------------------------------
def _mlp_kernel(x_ref, w1_ref, b1_ref, w2_ref, b2_ref, o_ref):
    # MXU inputs in bf16, accumulation + elementwise epilogue in f32
    # (v5e has no bf16 VPU).  If x already arrives bf16, the cast is a no-op.
    x = x_ref[...].astype(jnp.bfloat16)
    h = jnp.dot(x, w1_ref[...], preferred_element_type=jnp.float32)
    h = jnp.maximum(h + b1_ref[...], 0.0)
    y = jnp.dot(h.astype(jnp.bfloat16), w2_ref[...],
                preferred_element_type=jnp.float32)
    # Store only the real D_out columns (narrow, unpadded output block).
    o_ref[...] = (y + b2_ref[...]).astype(o_ref.dtype)


def mlp_forward(x, w1_bf16, b1_f32, w2_bf16, b2_f32, *, out_dtype=jnp.float32):
    """Fused MLP. x: [B, D_in] (f32 or bf16) -> [B, D_out] out_dtype."""
    B, D_in = x.shape
    H_pad = w1_bf16.shape[1]
    D_out = w2_bf16.shape[1]

    # Batch tile: big tiles amortize the ~0.35 us per-grid-step overhead; keep
    # grid >= 2 when the batch is large enough so the "parallel" axis can be
    # sharded across both v7x TensorCores.  Even at TB=4096 the double-buffered
    # (x, out) tiles + resident weights sit far below the 32 MiB scoped VMEM
    # default (v7x: 64 MiB physical).
    # TODO(synk): when the wrapped model grows to the real AD-NeRF width
    # (W~256, 8-10 layers), re-derive TB against the scoped VMEM limit and set
    # vmem_limit_bytes explicitly.
    if B > 8:
        TB = min(4096, _round_up(-(-B // 2), 8))
    else:
        TB = _round_up(max(B, 1), 8)
    grid = (pl.cdiv(B, TB),)

    out_itemsize = jnp.dtype(out_dtype).itemsize
    flops = 2 * B * (D_in * H_pad + H_pad * D_out)
    bytes_accessed = (
        x.size * x.dtype.itemsize
        + w1_bf16.size * w1_bf16.dtype.itemsize
        + w2_bf16.size * w2_bf16.dtype.itemsize
        + b1_f32.size * 4
        + b2_f32.size * 4
        + B * D_out * out_itemsize
    )

    return pl.pallas_call(
        _mlp_kernel,
        out_shape=jax.ShapeDtypeStruct((B, D_out), out_dtype),
        grid=grid,
        in_specs=[
            pl.BlockSpec((TB, D_in), lambda i: (i, 0)),         # streamed
            pl.BlockSpec((D_in, H_pad), lambda i: (0, 0)),      # resident
            pl.BlockSpec((1, H_pad), lambda i: (0, 0)),         # resident
            pl.BlockSpec((H_pad, D_out), lambda i: (0, 0)),     # resident
            pl.BlockSpec((1, D_out), lambda i: (0, 0)),         # resident
        ],
        out_specs=pl.BlockSpec((TB, D_out), lambda i: (i, 0)),
        compiler_params=pltpu.CompilerParams(
            dimension_semantics=("parallel",),
        ),
        cost_estimate=pl.CostEstimate(
            flops=flops, transcendentals=0, bytes_accessed=bytes_accessed
        ),
    )(x, w1_bf16, b1_f32, w2_bf16, b2_f32)


# ---------------------------------------------------------------------------
# myModel wrapper semantics (add_dummy / remove_dummy over the batch dim)
# ---------------------------------------------------------------------------
class MyModelPallas:
    def __init__(self, batch_size, gpu_ids, params, out_dtype=jnp.float32):
        self.batch_size = batch_size
        self.gpu_ids = gpu_ids
        self.bs_per_gpu = int(math.ceil(float(batch_size) / len(gpu_ids)))
        self.pad_bs = self.bs_per_gpu * len(gpu_ids) - batch_size
        self.out_dtype = out_dtype

        # --- pad wrapped-model params ONCE.  Hidden dim is padded to a
        #     multiple of 128 (lane-dense intermediate, zero rows/cols keep
        #     the math identical); the OUTPUT dim is left unpadded so the
        #     kernel writes only real columns (no padded-output round trip).
        w1, b1, w2, b2 = params
        d_in, h = w1.shape
        d_out = w2.shape[1]
        h_pad = _round_up(h, 128)
        self.d_out = d_out

        w1p = jnp.zeros((d_in, h_pad), jnp.float32).at[:, :h].set(w1)
        b1p = jnp.zeros((1, h_pad), jnp.float32).at[:, :h].set(b1)
        w2p = jnp.zeros((h_pad, d_out), jnp.float32).at[:h, :].set(w2)
        b2p = jnp.asarray(b2, jnp.float32).reshape(1, d_out)

        self.w1 = w1p.astype(jnp.bfloat16)   # MXU inputs in bf16
        self.b1 = b1p                        # epilogue stays f32
        self.w2 = w2p.astype(jnp.bfloat16)
        self.b2 = b2p

    # --- mirrors myModel.add_dummy_to_tensor ---
    def add_dummy_to_tensor(self, tensors, add_size=0):
        if add_size == 0 or tensors is None:
            return tensors
        if isinstance(tensors, (list, tuple)):
            return [self.add_dummy_to_tensor(t, add_size) for t in tensors]
        dummy = jnp.zeros_like(tensors)[:add_size]
        return jnp.concatenate([dummy, tensors], axis=0)

    # --- mirrors myModel.remove_dummy_from_tensor ---
    def remove_dummy_from_tensor(self, tensors, remove_size=0):
        if remove_size == 0 or tensors is None:
            return tensors
        if isinstance(tensors, (list, tuple)):
            return [self.remove_dummy_from_tensor(t, remove_size) for t in tensors]
        return tensors[remove_size:]

    # --- inner wrapped model (NeRF-style MLP) via the Pallas kernel ---
    def _inner_model(self, x, dummy_bs=0):
        return mlp_forward(x, self.w1, self.b1, self.w2, self.b2,
                           out_dtype=self.out_dtype)

    # --- mirrors myModel.forward ---
    def __call__(self, *inputs, **kwargs):
        # Fast path: every dummy row that would be added is removed again
        # (pad_bs == 0, or pad_bs == bs_per_gpu == 1 so forward strips the one
        # dummy row).  The inner model is row-wise, so skipping the concat /
        # slice is mathematically identical and saves a full-batch HBM copy.
        if self.pad_bs == 0 or (self.pad_bs == 1 and self.bs_per_gpu == 1):
            return self._inner_model(*inputs, **kwargs, dummy_bs=self.pad_bs)

        # General (faithful) path: dummy rows survive in the output, so mirror
        # the original forward exactly.
        inputs = self.add_dummy_to_tensor(inputs, self.pad_bs)
        outputs = self._inner_model(*inputs, **kwargs, dummy_bs=self.pad_bs)
        if self.pad_bs == self.bs_per_gpu:
            return self.remove_dummy_from_tensor(outputs, 1)
        return outputs


# ---------------------------------------------------------------------------
# Main
# ---------------------------------------------------------------------------
if __name__ == "__main__":
    key = jax.random.PRNGKey(0)

    # Module-consistent configuration:
    #   batch_size=3 on 4 "GPUs" => bs_per_gpu=1, pad_bs=1 (== bs_per_gpu)
    #   so the original forward both adds a dummy row AND strips it.
    batch_size = 3
    gpu_ids = [0, 1, 2, 3]

    D_in, H, D_out = 32, 64, 16

    k_x, k_w1, k_b1, k_w2, k_b2, k_x2 = jax.random.split(key, 6)
    x = jax.random.normal(k_x, (batch_size, D_in), dtype=jnp.float32)

    # Deterministic synthetic parameters (no checkpoint load).
    w1 = jax.random.normal(k_w1, (D_in, H), dtype=jnp.float32) * (1.0 / math.sqrt(D_in))
    b1 = jax.random.normal(k_b1, (1, H), dtype=jnp.float32) * 0.01
    w2 = jax.random.normal(k_w2, (H, D_out), dtype=jnp.float32) * (1.0 / math.sqrt(H))
    b2 = jax.random.normal(k_b2, (1, D_out), dtype=jnp.float32) * 0.01

    model = MyModelPallas(batch_size, gpu_ids, (w1, b1, w2, b2))

    out = model(x)
    out = jax.block_until_ready(out)

    # Batch dim back to original size after (logical) dummy add/remove.
    assert out.shape == (batch_size, D_out), out.shape

    # Reference with matching bf16 matmul inputs / f32 accumulation.
    def ref_mlp(xx):
        hh = jnp.maximum(
            jnp.dot(xx.astype(jnp.bfloat16), w1.astype(jnp.bfloat16),
                    preferred_element_type=jnp.float32) + b1,
            0.0,
        )
        return (
            jnp.dot(hh.astype(jnp.bfloat16), w2.astype(jnp.bfloat16),
                    preferred_element_type=jnp.float32)
            + b2
        )

    ref = ref_mlp(x)
    assert jnp.allclose(out, ref, atol=2e-3, rtol=2e-3), float(
        jnp.max(jnp.abs(out - ref))
    )

    # Loose sanity check against the full-f32 math.
    ref_f32 = jnp.maximum(x @ w1 + b1, 0.0) @ w2 + b2
    assert jnp.allclose(out, ref_f32, atol=5e-2, rtol=5e-2)

    # Faithful path: batch_size=5 on 3 "GPUs" => bs_per_gpu=2, pad_bs=1
    # (pad_bs != bs_per_gpu), so one dummy row is added and SURVIVES in the
    # output, exactly like the original module.
    bs2, gpus2 = 5, [0, 1, 2]
    x2 = jax.random.normal(k_x2, (bs2, D_in), dtype=jnp.float32)
    model2 = MyModelPallas(bs2, gpus2, (w1, b1, w2, b2))
    out2 = jax.block_until_ready(model2(x2))
    assert out2.shape == (bs2 + 1, D_out), out2.shape
    # Row 0 is the processed dummy (zero-input) row; remaining rows match x2.
    ref_dummy = ref_mlp(jnp.zeros((1, D_in), jnp.float32))
    assert jnp.allclose(out2[:1], ref_dummy, atol=2e-3, rtol=2e-3)
    assert jnp.allclose(out2[1:], ref_mlp(x2), atol=2e-3, rtol=2e-3)

    print("KERNEL_OK")
</pallas_src>

<mosaic_0001>
module attributes {stable_mosaic.version = 11 : i64} {
  func.func @_mlp_kernel(%arg0: i32, %arg1: memref<8x32xf32, #tpu.memory_space<vmem>>, %arg2: memref<32x128xbf16, #tpu.memory_space<vmem>>, %arg3: memref<1x128xf32, #tpu.memory_space<vmem>>, %arg4: memref<128x16xbf16, #tpu.memory_space<vmem>>, %arg5: memref<1x16xf32, #tpu.memory_space<vmem>>, %arg6: memref<8x16xf32, #tpu.memory_space<vmem>>) attributes {dimension_semantics = [#tpu.dimension_semantics<parallel>], iteration_bounds = array<i64: 1>, scalar_prefetch = 0 : i64, scratch_operands = 0 : i64, tpu.core_type = #tpu.core_type<tc>, window_params = [{transform_indices = @transform_0, window_bounds = array<i64: 8, 32>}, {pipeline_mode = #tpu.pipeline_mode<synchronous>, transform_indices = @transform_1, window_bounds = array<i64: 32, 128>}, {pipeline_mode = #tpu.pipeline_mode<synchronous>, transform_indices = @transform_2, window_bounds = array<i64: 1, 128>}, {pipeline_mode = #tpu.pipeline_mode<synchronous>, transform_indices = @transform_3, window_bounds = array<i64: 128, 16>}, {pipeline_mode = #tpu.pipeline_mode<synchronous>, transform_indices = @transform_4, window_bounds = array<i64: 1, 16>}, {transform_indices = @transform_5, window_bounds = array<i64: 8, 16>}]} {
    %c0 = arith.constant 0 : index
    %c0_0 = arith.constant 0 : index
    %0 = vector.load %arg1[%c0, %c0_0] : memref<8x32xf32, #tpu.memory_space<vmem>>, vector<8x32xf32>
    %1 = arith.truncf %0 : vector<8x32xf32> to vector<8x32xbf16>
    %c0_1 = arith.constant 0 : index
    %c0_2 = arith.constant 0 : index
    %2 = vector.load %arg2[%c0_1, %c0_2] : memref<32x128xbf16, #tpu.memory_space<vmem>>, vector<32x128xbf16>
    %cst = arith.constant dense<0.000000e+00> : vector<8x128xf32>
    %3 = tpu.matmul %1, %2, %cst {dimension_numbers = #tpu.dot_dimension_numbers<[1], [0], [0], [1], [0, 0, 1, 1], [], []>} : vector<8x32xbf16>, vector<32x128xbf16>, vector<8x128xf32> -> vector<8x128xf32>
    %c0_3 = arith.constant 0 : index
    %c0_4 = arith.constant 0 : index
    %4 = vector.load %arg3[%c0_3, %c0_4] : memref<1x128xf32, #tpu.memory_space<vmem>>, vector<1x128xf32>
    %5 = vector.broadcast %4 : vector<1x128xf32> to vector<8x128xf32>
    %6 = arith.addf %3, %5 : vector<8x128xf32>
    %cst_5 = arith.constant 0.000000e+00 : f32
    %7 = vector.broadcast %cst_5 : f32 to vector<8x128xf32>
    %8 = arith.maximumf %6, %7 : vector<8x128xf32>
    %9 = arith.truncf %8 : vector<8x128xf32> to vector<8x128xbf16>
    %c0_6 = arith.constant 0 : index
    %c0_7 = arith.constant 0 : index
    %10 = vector.load %arg4[%c0_6, %c0_7] : memref<128x16xbf16, #tpu.memory_space<vmem>>, vector<128x16xbf16>
    %cst_8 = arith.constant dense<0.000000e+00> : vector<8x16xf32>
    %11 = tpu.matmul %9, %10, %cst_8 {dimension_numbers = #tpu.dot_dimension_numbers<[1], [0], [0], [1], [0, 0, 1, 1], [], []>} : vector<8x128xbf16>, vector<128x16xbf16>, vector<8x16xf32> -> vector<8x16xf32>
    %c0_9 = arith.constant 0 : index
    %c0_10 = arith.constant 0 : index
    %12 = vector.load %arg5[%c0_9, %c0_10] : memref<1x16xf32, #tpu.memory_space<vmem>>, vector<1x16xf32>
    %13 = vector.broadcast %12 : vector<1x16xf32> to vector<8x16xf32>
    %14 = arith.addf %11, %13 : vector<8x16xf32>
    %c0_11 = arith.constant 0 : index
    %c0_12 = arith.constant 0 : index
    %15 = vector.load %arg6[%c0_11, %c0_12] : memref<8x16xf32, #tpu.memory_space<vmem>>, vector<8x16xf32>
    tpu.vector_store %arg6[%c0_11, %c0_12], %14 {strides = array<i32>} : memref<8x16xf32, #tpu.memory_space<vmem>>, vector<8x16xf32>,
    return
  }
  func.func @transform_0(%arg0: i32) -> (i32, i32) {
    %c0_i32 = arith.constant 0 : i32
    %c0_i32_0 = arith.constant 0 : i32
    return %arg0, %c0_i32 : i32, i32
  }
  func.func @transform_1(%arg0: i32) -> (i32, i32) {
    %c0_i32 = arith.constant 0 : i32
    %c0_i32_0 = arith.constant 0 : i32
    %c0_i32_1 = arith.constant 0 : i32
    return %c0_i32, %c0_i32_0 : i32, i32
  }
  func.func @transform_2(%arg0: i32) -> (i32, i32) {
    %c0_i32 = arith.constant 0 : i32
    %c0_i32_0 = arith.constant 0 : i32
    %c0_i32_1 = arith.constant 0 : i32
    return %c0_i32, %c0_i32_0 : i32, i32
  }
  func.func @transform_3(%arg0: i32) -> (i32, i32) {
    %c0_i32 = arith.constant 0 : i32
    %c0_i32_0 = arith.constant 0 : i32
    %c0_i32_1 = arith.constant 0 : i32
    return %c0_i32, %c0_i32_0 : i32, i32
  }
  func.func @transform_4(%arg0: i32) -> (i32, i32) {
    %c0_i32 = arith.constant 0 : i32
    %c0_i32_0 = arith.constant 0 : i32
    %c0_i32_1 = arith.constant 0 : i32
    return %c0_i32, %c0_i32_0 : i32, i32
  }
  func.func @transform_5(%arg0: i32) -> (i32, i32) {
    %c0_i32 = arith.constant 0 : i32
    %c0_i32_0 = arith.constant 0 : i32
    return %arg0, %c0_i32 : i32, i32
  }
}

</mosaic_0001>

<llo_original>
// kernel: tpu_custom_call.1
$region0: #{tpu_custom_call.1}
  #allocation0 [shape = 'u32[]', space=smem, size = 0x4, offset = 0x4, fixed_abs, tag = 'smem constant byte address 0x4 - core index']
  #allocation1 [shape = 'u32[144,128]{1,0:T(1,128)}', space=vmem, size = 0x12000, scoped, tag = 'internal scratch']
  %s0 = inlined_call_operand.vmem [shape: f32[3,32], index: 0, kind: input, shape index: {}]
  %s1 = inlined_call_operand.vmem [shape: bf16[32,128], index: 1, kind: input, shape index: {}]
  %s2 = inlined_call_operand.vmem [shape: f32[1,128], index: 2, kind: input, shape index: {}]
  %s3 = inlined_call_operand.vmem [shape: bf16[128,16], index: 3, kind: input, shape index: {}]
  %s4 = inlined_call_operand.vmem [shape: f32[1,16], index: 4, kind: input, shape index: {}]
  %s5 = inlined_call_operand.hbm [shape: f32[3,16], index: 5, kind: output, shape index: {}]
  %s6 = sld [smem:[#allocation0]]
  $region30: #{tpu_custom_call.1} parent=0
    _
  %s8 = ssub.s32 1, %s6
  %s9 = scalar_select 0, %s8, %s6
  $region1: #{tpu_custom_call.1} parent=0
    #allocation2 [shape = 'u8[4096]{0}', space=vmem, size = 0x1000, scoped, tag = 'output window, operand 0, single buffered']
    #allocation3 [shape = 's32[1]{0}', space=sflag, size = 0x4, scoped, tag = 'scoped memory for tpu_custom_call.1']
    %10 = vsyncpa [#allocation3], 0
    // Predicated region
    $region2: #{tpu_custom_call.1} parent=1 // pred_check
      _
    $region3: #{tpu_custom_call.1} parent=1 // pred_check_branch
      %12 = sbr.rel (0) target = $region5
    $region4: #{tpu_custom_call.1} parent=1 // pred_region
      _
    $region5: #{tpu_custom_call.1} parent=1 // pred_fallthru
      _
    // Predicated region
    $region6: #{tpu_custom_call.1} parent=1 // pred_check
      _
    $region7: #{tpu_custom_call.1} parent=1 // pred_check_branch
      %14 = sbr.rel (0) target = $region9
    $region8: #{tpu_custom_call.1} parent=1 // pred_region
      _
    $region9: #{tpu_custom_call.1} parent=1 // pred_fallthru
      _
    // Predicated region
    $region10: #{tpu_custom_call.1} parent=1 // pred_check
      _
    $region11: #{tpu_custom_call.1} parent=1 // pred_check_branch
      %16 = sbr.rel (0) target = $region13
    $region12: #{tpu_custom_call.1} parent=1 // pred_region
      _
    $region13: #{tpu_custom_call.1} parent=1 // pred_fallthru
      _
    // Predicated region
    $region14: #{tpu_custom_call.1} parent=1 // pred_check
      _
    $region15: #{tpu_custom_call.1} parent=1 // pred_check_branch
      %18 = sbr.rel (0) target = $region17
    $region16: #{tpu_custom_call.1} parent=1 // pred_region
      _
    $region17: #{tpu_custom_call.1} parent=1 // pred_fallthru
      _
    // Predicated region
    $region18: #{tpu_custom_call.1} parent=1 // pred_check
      _
    $region19: #{tpu_custom_call.1} parent=1 // pred_check_branch
      %20 = sbr.rel (0) target = $region21
    $region20: #{tpu_custom_call.1} parent=1 // pred_region
      _
    $region21: #{tpu_custom_call.1} parent=1 // pred_fallthru
      _
    %v22 = vld [vmem:[%s0] sm:$0xff]
    %v23 = vpack.c.bf16 %v22, %v22
    %v24 = vld [vmem:[%s1] sm:$0xf]
    %v25 = vld [vmem:[%s1 + $0x4] sm:$0xf]
    %v26 = vld [vmem:[%s1 + $0x8] sm:$0xf]
    %v27 = vld [vmem:[%s1 + $0xc] sm:$0xf]
    %v28 = vld [vmem:[%s2] sm:$0x1]
    %v30 = vlaneseq
    %v31 = vshrl.u32 %v30, 7
    %v32 = vsub.s32 0, %v31
    %v33 = vrot.slane %v28, %v32
    %v39 = vunpack.c.l.b16 %v24
    %v40 = vunpack.c.l.b16 %v25
    %v41 = vunpack.c.l.b16 %v26
    %v42 = vunpack.c.l.b16 %v27
    %v43 = vpack.c.b16 %v40, %v39
    %v44 = vpack.c.b16 %v42, %v41
    %vm47 = vcmask 261120
    %v49 = vsel %vm47, %v23, 0
    %51 = vmatprep.subr.bf16.mxu0 0
    %52 = vmatpush1.bf16.msra.mxu0 0
    %53 = vmatprep.subr.bf16.mxu0 0
    %54 = vmatpush1.bf16.msra.mxu0 0
    %55 = vmatprep.subr.bf16.mxu0 0
    %56 = vmatpush1.bf16.msra.mxu0 0
    %57 = vmatprep.subr.bf16.mxu0 0
    %58 = vmatpush1.bf16.msra.mxu0 0
    %59 = vmatprep.subr.bf16.mxu0 0
    %60 = vmatpush1.bf16.msra.mxu0 0
    %61 = vmatprep.subr.bf16.mxu0 0
    %62 = vmatpush1.bf16.msra.mxu0 0
    %63 = vmatprep.subr.bf16.mxu0 0
    %64 = vmatpush1.bf16.msra.mxu0 %v44
    %65 = vmatprep.subr.bf16.mxu0 0
    %66 = vmatpush1.bf16.msra.mxu0 %v43
    %67 = vmatprep.subr.bf16.mxu0 0
    %68 = vmatpush2.bf16.msra.mxu0 0
    %69 = vmatprep.subr.bf16.mxu0 0
    %70 = vmatpush2.bf16.msra.mxu0 0
    %71 = vmatprep.subr.bf16.mxu0 0
    %72 = vmatpush2.bf16.msra.mxu0 0
    %73 = vmatprep.subr.bf16.mxu0 0
    %74 = vmatpush2.bf16.msra.mxu0 0
    %75 = vmatprep.subr.bf16.mxu0 0
    %76 = vmatpush2.bf16.msra.mxu0 0
    %77 = vmatprep.subr.bf16.mxu0 0
    %78 = vmatpush2.bf16.msra.mxu0 0
    %79 = vmatprep.subr.bf16.mxu0 0
    %80 = vmatpush2.bf16.msra.mxu0 0
    %81 = vmatprep.subr.bf16.mxu0 0
    %82 = vmatpush2.bf16.msra.mxu0 0
    %83 = vmatprep.mubr.bf16.mxu0 0
    %84 = vmatmul.mubr.bf16.gmra.mxu0 %v49
    %v85 = vpop.f32.mrf.mxu0
    %v86 = vadd.f32 %v33, %v85
    %v87 = vpop.f32.mrf.mxu0
    %v88 = vpop.f32.mrf.mxu0
    %v89 = vpop.f32.mrf.mxu0
    %90 = vdwg.mxu0
    %v91 = vmax.f32 %v86, 0.0
    %v92 = vpack.c.bf16 %v91, %v91
    %v93 = vld [vmem:[%s3] sm:$0xf]
    %v94 = vld [vmem:[%s3 + $0x4] sm:$0xf]
    %v95 = vld [vmem:[%s3 + $0x8] sm:$0xf]
    %v96 = vld [vmem:[%s3 + $0xc] sm:$0xf]
    %v97 = vld [vmem:[%s3 + $0x10] sm:$0xf]
    %v98 = vld [vmem:[%s3 + $0x14] sm:$0xf]
    %v99 = vld [vmem:[%s3 + $0x18] sm:$0xf]
    %v100 = vld [vmem:[%s3 + $0x1c] sm:$0xf]
    %v101 = vld [vmem:[%s3 + $0x20] sm:$0xf]
    %v102 = vld [vmem:[%s3 + $0x24] sm:$0xf]
    %v103 = vld [vmem:[%s3 + $0x28] sm:$0xf]
    %v104 = vld [vmem:[%s3 + $0x2c] sm:$0xf]
    %v105 = vld [vmem:[%s3 + $0x30] sm:$0xf]
    %v106 = vld [vmem:[%s3 + $0x34] sm:$0xf]
    %v107 = vld [vmem:[%s3 + $0x38] sm:$0xf]
    %v108 = vld [vmem:[%s3 + $0x3c] sm:$0xf]
    %v109 = vld [vmem:[%s4] sm:$0x1]
    %v111 = vlaneseq
    %v112 = vshrl.u32 %v111, 7
    %v113 = vsub.s32 0, %v112
    %v114 = vrot.slane %v109, %v113
    %v132 = vunpack.c.l.b16 %v93
    %v133 = vunpack.c.l.b16 %v94
    %v134 = vunpack.c.l.b16 %v95
    %v135 = vunpack.c.l.b16 %v96
    %v136 = vunpack.c.l.b16 %v97
    %v137 = vunpack.c.l.b16 %v98
    %v138 = vunpack.c.l.b16 %v99
    %v139 = vunpack.c.l.b16 %v100
    %v140 = vunpack.c.l.b16 %v101
    %v141 = vunpack.c.l.b16 %v102
    %v142 = vunpack.c.l.b16 %v103
    %v143 = vunpack.c.l.b16 %v104
    %v144 = vunpack.c.l.b16 %v105
    %v145 = vunpack.c.l.b16 %v106
    %v146 = vunpack.c.l.b16 %v107
    %v147 = vunpack.c.l.b16 %v108
    %v148 = vpack.c.b16 %v133, %v132
    %v149 = vpack.c.b16 %v135, %v134
    %v150 = vpack.c.b16 %v137, %v136
    %v151 = vpack.c.b16 %v139, %v138
    %v152 = vpack.c.b16 %v141, %v140
    %v153 = vpack.c.b16 %v143, %v142
    %v154 = vpack.c.b16 %v145, %v144
    %v155 = vpack.c.b16 %v147, %v146
    %164 = vmatprep.subr.bf16.mxu0 0
    %165 = vmatpush1.bf16.msra.mxu0 %v155
    %166 = vmatprep.subr.bf16.mxu0 0
    %167 = vmatpush1.bf16.msra.mxu0 %v154
    %168 = vmatprep.subr.bf16.mxu0 0
    %169 = vmatpush1.bf16.msra.mxu0 %v153
    %170 = vmatprep.subr.bf16.mxu0 0
    %171 = vmatpush1.bf16.msra.mxu0 %v152
    %172 = vmatprep.subr.bf16.mxu0 0
    %173 = vmatpush1.bf16.msra.mxu0 %v151
    %174 = vmatprep.subr.bf16.mxu0 0
    %175 = vmatpush1.bf16.msra.mxu0 %v150
    %176 = vmatprep.subr.bf16.mxu0 0
    %177 = vmatpush1.bf16.msra.mxu0 %v149
    %178 = vmatprep.subr.bf16.mxu0 0
    %179 = vmatpush1.bf16.msra.mxu0 %v148
    %180 = vmatprep.subr.bf16.mxu0 0
    %181 = vmatpush2.bf16.msra.mxu0 0
    %182 = vmatprep.subr.bf16.mxu0 0
    %183 = vmatpush2.bf16.msra.mxu0 0
    %184 = vmatprep.subr.bf16.mxu0 0
    %185 = vmatpush2.bf16.msra.mxu0 0
    %186 = vmatprep.subr.bf16.mxu0 0
    %187 = vmatpush2.bf16.msra.mxu0 0
    %188 = vmatprep.subr.bf16.mxu0 0
    %189 = vmatpush2.bf16.msra.mxu0 0
    %190 = vmatprep.subr.bf16.mxu0 0
    %191 = vmatpush2.bf16.msra.mxu0 0
    %192 = vmatprep.subr.bf16.mxu0 0
    %193 = vmatpush2.bf16.msra.mxu0 0
    %194 = vmatprep.subr.bf16.mxu0 0
    %195 = vmatpush2.bf16.msra.mxu0 0
    %196 = vmatprep.mubr.bf16.mxu0 0
    %197 = vmatmul.mubr.bf16.gmra.mxu0 %v92
    %v198 = vpop.f32.mrf.mxu0
    %v199 = vadd.f32 %v114, %v198
    %v200 = vpop.f32.mrf.mxu0
    %v201 = vpop.f32.mrf.mxu0
    %v202 = vpop.f32.mrf.mxu0
    %203 = vdwg.mxu0
    %vm204 = vcmask 130048
    %205 = vst.msk [vmem:[#allocation2] sm:$0xff] %vm204, %v199
    // Predicated region
    $region22: #{tpu_custom_call.1} parent=1 // pred_check
      _
    $region23: #{tpu_custom_call.1} parent=1 // pred_check_branch
      %207 = sbr.rel (0) target = $region25
    $region24: #{tpu_custom_call.1} parent=1 // pred_region
      %s209 = ssub.s32 128, 64
      %210 = vsyncadd [#allocation3], %s209
      %s211 = sshll.u32 [#allocation2], 4
      %s212 = int_to_ptr.vmem [resolvable:$true] %s211
      %217 = dma.vmem_to_hbm [thread:$0]  %s212, 64, %s5, [#allocation3], 64, 64, 4
    $region25: #{tpu_custom_call.1} parent=1 // pred_fallthru
      _
    // Predicated region
    $region26: #{tpu_custom_call.1} parent=1 // pred_check
      _
    $region27: #{tpu_custom_call.1} parent=1 // pred_check_branch
      %219 = sbr.rel (0) target = $region29
    $region28: #{tpu_custom_call.1} parent=1 // pred_region
      %220 = dma.done [#allocation3], 128
    $region29: #{tpu_custom_call.1} parent=1 // pred_fallthru
      _
    %221 = vsyncpa [#allocation3], 1

</llo_original>
